<compile_context>
chip_gen: v6e
topology: v6e:2x2x1
jax: 0.10.0
libtpu: 0.0.40
codegen_flags: <defaults>
</compile_context>

<pallas_src>
import jax
import jax.numpy as jnp
from jax.experimental import pallas as pl
from jax.experimental.pallas import tpu as pltpu


def _embed_kernel(x_ref, w_ref, b_ref, o_ref):
    # x_ref: (tm, K) f32   w_ref: (K, Np) bf16   b_ref: (1, Np) f32
    # o_ref: (tm, Np) bf16 (or f32 if requested)
    x_bf = x_ref[...].astype(w_ref.dtype)            # cast feeds the MXU only
    acc = jnp.dot(x_bf, w_ref[...], preferred_element_type=jnp.float32)
    acc = acc + b_ref[...]                           # f32 bias broadcast
    o_ref[...] = jnp.maximum(acc, 0.0).astype(o_ref.dtype)


def _round_up(x, m):
    return ((x + m - 1) // m) * m


def prepare_embedding_params(weight, bias, compute_dtype=jnp.bfloat16):
    """One-time prep (hoist out of the hot path): W^T in bf16, lane-padded to
    a multiple of 128; bias as an f32 (1, n_pad) row."""
    N, K = weight.shape
    n_pad = 128 * pl.cdiv(N, 128)
    w_t = weight.T.astype(compute_dtype)              # (K, N)
    b2d = bias.astype(jnp.float32).reshape(1, N)
    if n_pad != N:
        w_t = jnp.pad(w_t, ((0, 0), (0, n_pad - N)))
        b2d = jnp.pad(b2d, ((0, 0), (0, n_pad - N)))
    return w_t, b2d


def data_embedding_prepared(x, w_t, b2d, n_out, *, tm=1024,
                            out_dtype=jnp.bfloat16):
    """x: (B, S, K) f32; w_t: (K, n_pad) bf16; b2d: (1, n_pad) f32 -> (B, S, n_out)."""
    B, S, K = x.shape
    Kw, n_pad = w_t.shape
    assert K == Kw and n_pad % 128 == 0 and b2d.shape == (1, n_pad)
    M = B * S

    x2d = x.reshape(M, K)                              # metadata-only, stays f32

    # Row tile: multiple of 16 (bf16 packs 16 sublanes/vreg), >= 2 grid steps
    # for large M (v7x megacore), never (much) larger than M itself.
    half_rows = _round_up(pl.cdiv(M, 2), 256)
    tm_eff = max(16, min(_round_up(tm, 16), half_rows, _round_up(M, 16)))
    grid = (pl.cdiv(M, tm_eff),)

    # --- VMEM budget (sublane/lane padded; conservative: 2 bufs for params) --
    x_sz = jnp.dtype(x.dtype).itemsize
    w_sz = jnp.dtype(w_t.dtype).itemsize
    out_sz = jnp.dtype(out_dtype).itemsize
    k_lane = _round_up(K, 128)
    k_sub = _round_up(K, 8)
    vmem_bytes = (
        2 * tm_eff * k_lane * x_sz          # double-buffered x tiles (f32)
        + 2 * k_sub * n_pad * w_sz          # resident weight
        + 2 * 8 * n_pad * 4                 # bias row (sublane-padded)
        + 2 * tm_eff * n_pad * out_sz       # double-buffered output tiles
    )
    try:
        phys_vmem = int(getattr(pltpu.get_tpu_info(), "vmem_capacity_bytes",
                                64 << 20))
    except Exception:
        phys_vmem = 64 << 20                # conservative: v7x per-core VMEM
    cap = max(32 << 20, phys_vmem - (16 << 20))
    vmem_limit = int(min(max(vmem_bytes + (8 << 20), 16 << 20), cap))

    def build(single_buffer_params):
        pm = ({"pipeline_mode": pl.Buffered(1)}
              if single_buffer_params else {})
        return pl.pallas_call(
            _embed_kernel,
            out_shape=jax.ShapeDtypeStruct((M, n_pad), out_dtype),
            grid=grid,
            in_specs=[
                pl.BlockSpec((tm_eff, K), lambda i: (i, 0)),        # x row tile
                pl.BlockSpec((K, n_pad), lambda i: (0, 0), **pm),   # resident W
                pl.BlockSpec((1, n_pad), lambda i: (0, 0), **pm),   # bias row
            ],
            out_specs=pl.BlockSpec((tm_eff, n_pad), lambda i: (i, 0)),
            compiler_params=pltpu.CompilerParams(
                dimension_semantics=("parallel",),   # shard rows across TCs (v7x)
                vmem_limit_bytes=vmem_limit,
            ),
        )

    try:
        out2d = build(True)(x2d, w_t, b2d)
    except Exception:
        # Fallback if Buffered(1) pipeline mode is unsupported on this build.
        out2d = build(False)(x2d, w_t, b2d)

    if n_pad != n_out:                      # only when n_out isn't lane-aligned
        out2d = out2d[:, :n_out]
    return out2d.reshape(B, S, n_out)


def data_embedding(x, weight, bias, **kwargs):
    """Convenience one-shot wrapper (prefer hoisting prepare_embedding_params)."""
    w_t, b2d = prepare_embedding_params(weight, bias)
    return data_embedding_prepared(x, w_t, b2d, weight.shape[0], **kwargs)


if __name__ == "__main__":
    # Small shapes consistent with the module: embed_dim = 256 per the spec.
    batch, seq, input_dim, embed_dim = 2, 8, 16, 256

    key = jax.random.PRNGKey(0)
    kx, kw, kb = jax.random.split(key, 3)

    x = jax.random.normal(kx, (batch, seq, input_dim), dtype=jnp.float32)

    # nn.Linear default init: U(-1/sqrt(K), 1/sqrt(K)); weight stored (N, K).
    bound = 1.0 / (input_dim ** 0.5)
    weight = jax.random.uniform(kw, (embed_dim, input_dim),
                                minval=-bound, maxval=bound, dtype=jnp.float32)
    bias = jax.random.uniform(kb, (embed_dim,),
                              minval=-bound, maxval=bound, dtype=jnp.float32)

    # Hoisted one-time parameter prep, then the kernel call.
    w_t, b2d = prepare_embedding_params(weight, bias)
    out = data_embedding_prepared(x, w_t, b2d, embed_dim)
    out = jax.block_until_ready(out)

    assert out.shape == (batch, seq, embed_dim)
    assert out.dtype == jnp.bfloat16

    # Tight check against a reference using the same compute dtypes
    # (bf16 MXU inputs, f32 accumulate + bias + ReLU).
    ref_bf = jnp.maximum(
        jnp.einsum("bsk,nk->bsn", x.astype(jnp.bfloat16),
                   weight.astype(jnp.bfloat16),
                   preferred_element_type=jnp.float32) + bias,
        0.0)
    assert jnp.allclose(out.astype(jnp.float32), ref_bf, atol=1e-2, rtol=1e-2)

    # Loose check against the pure-f32 PyTorch-equivalent reference
    # (bf16 MXU inputs + bf16 output introduce ~1e-2-scale rounding).
    ref_f32 = jnp.maximum(jnp.einsum("bsk,nk->bsn", x, weight) + bias, 0.0)
    assert jnp.allclose(out.astype(jnp.float32), ref_f32, atol=5e-2, rtol=5e-2)

    print("KERNEL_OK")
</pallas_src>

<mosaic_0001>
module attributes {stable_mosaic.version = 11 : i64} {
  func.func @_embed_kernel(%arg0: i32, %arg1: memref<16x16xf32, #tpu.memory_space<vmem>>, %arg2: memref<16x256xbf16, #tpu.memory_space<vmem>>, %arg3: memref<1x256xf32, #tpu.memory_space<vmem>>, %arg4: memref<16x256xbf16, #tpu.memory_space<vmem>>) attributes {dimension_semantics = [#tpu.dimension_semantics<parallel>], iteration_bounds = array<i64: 1>, scalar_prefetch = 0 : i64, scratch_operands = 0 : i64, tpu.core_type = #tpu.core_type<tc>, window_params = [{transform_indices = @transform_0, window_bounds = array<i64: 16, 16>}, {pipeline_mode = #tpu.pipeline_mode<synchronous>, transform_indices = @transform_1, window_bounds = array<i64: 16, 256>}, {pipeline_mode = #tpu.pipeline_mode<synchronous>, transform_indices = @transform_2, window_bounds = array<i64: 1, 256>}, {transform_indices = @transform_3, window_bounds = array<i64: 16, 256>}]} {
    %c0 = arith.constant 0 : index
    %c0_0 = arith.constant 0 : index
    %0 = vector.load %arg1[%c0, %c0_0] : memref<16x16xf32, #tpu.memory_space<vmem>>, vector<16x16xf32>
    %1 = arith.truncf %0 : vector<16x16xf32> to vector<16x16xbf16>
    %c0_1 = arith.constant 0 : index
    %c0_2 = arith.constant 0 : index
    %2 = vector.load %arg2[%c0_1, %c0_2] : memref<16x256xbf16, #tpu.memory_space<vmem>>, vector<16x256xbf16>
    %cst = arith.constant dense<0.000000e+00> : vector<16x256xf32>
    %3 = tpu.matmul %1, %2, %cst {dimension_numbers = #tpu.dot_dimension_numbers<[1], [0], [0], [1], [0, 0, 1, 1], [], []>} : vector<16x16xbf16>, vector<16x256xbf16>, vector<16x256xf32> -> vector<16x256xf32>
    %c0_3 = arith.constant 0 : index
    %c0_4 = arith.constant 0 : index
    %4 = vector.load %arg3[%c0_3, %c0_4] : memref<1x256xf32, #tpu.memory_space<vmem>>, vector<1x256xf32>
    %5 = vector.broadcast %4 : vector<1x256xf32> to vector<16x256xf32>
    %6 = arith.addf %3, %5 : vector<16x256xf32>
    %cst_5 = arith.constant 0.000000e+00 : f32
    %7 = vector.broadcast %cst_5 : f32 to vector<16x256xf32>
    %8 = arith.maximumf %6, %7 : vector<16x256xf32>
    %9 = arith.truncf %8 : vector<16x256xf32> to vector<16x256xbf16>
    %c0_6 = arith.constant 0 : index
    %c0_7 = arith.constant 0 : index
    %10 = vector.load %arg4[%c0_6, %c0_7] : memref<16x256xbf16, #tpu.memory_space<vmem>>, vector<16x256xbf16>
    tpu.vector_store %arg4[%c0_6, %c0_7], %9 {strides = array<i32>} : memref<16x256xbf16, #tpu.memory_space<vmem>>, vector<16x256xbf16>,
    return
  }
  func.func @transform_0(%arg0: i32) -> (i32, i32) {
    %c0_i32 = arith.constant 0 : i32
    %c0_i32_0 = arith.constant 0 : i32
    return %arg0, %c0_i32 : i32, i32
  }
  func.func @transform_1(%arg0: i32) -> (i32, i32) {
    %c0_i32 = arith.constant 0 : i32
    %c0_i32_0 = arith.constant 0 : i32
    %c0_i32_1 = arith.constant 0 : i32
    return %c0_i32, %c0_i32_0 : i32, i32
  }
  func.func @transform_2(%arg0: i32) -> (i32, i32) {
    %c0_i32 = arith.constant 0 : i32
    %c0_i32_0 = arith.constant 0 : i32
    %c0_i32_1 = arith.constant 0 : i32
    return %c0_i32, %c0_i32_0 : i32, i32
  }
  func.func @transform_3(%arg0: i32) -> (i32, i32) {
    %c0_i32 = arith.constant 0 : i32
    %c0_i32_0 = arith.constant 0 : i32
    return %arg0, %c0_i32 : i32, i32
  }
}

module attributes {stable_mosaic.version = 11 : i64} {
  func.func @_embed_kernel(%arg0: i32, %arg1: memref<16x16xf32, #tpu.memory_space<vmem>>, %arg2: memref<16x256xbf16, #tpu.memory_space<vmem>>, %arg3: memref<1x256xf32, #tpu.memory_space<vmem>>, %arg4: memref<16x256xbf16, #tpu.memory_space<vmem>>) attributes {dimension_semantics = [#tpu.dimension_semantics<parallel>], iteration_bounds = array<i64: 1>, scalar_prefetch = 0 : i64, scratch_operands = 0 : i64, tpu.core_type = #tpu.core_type<tc>, window_params = [{transform_indices = @transform_0, window_bounds = array<i64: 16, 16>}, {pipeline_mode = #tpu.pipeline_mode<synchronous>, transform_indices = @transform_1, window_bounds = array<i64: 16, 256>}, {pipeline_mode = #tpu.pipeline_mode<synchronous>, transform_indices = @transform_2, window_bounds = array<i64: 1, 256>}, {transform_indices = @transform_3, window_bounds = array<i64: 16, 256>}]} {
    %c0 = arith.constant 0 : index
    %c0_0 = arith.constant 0 : index
    %0 = vector.load %arg1[%c0, %c0_0] : memref<16x16xf32, #tpu.memory_space<vmem>>, vector<16x16xf32>
    %1 = arith.truncf %0 : vector<16x16xf32> to vector<16x16xbf16>
    %c0_1 = arith.constant 0 : index
    %c0_2 = arith.constant 0 : index
    %2 = vector.load %arg2[%c0_1, %c0_2] : memref<16x256xbf16, #tpu.memory_space<vmem>>, vector<16x256xbf16>
    %cst = arith.constant dense<0.000000e+00> : vector<16x256xf32>
    %3 = tpu.matmul %1, %2, %cst {dimension_numbers = #tpu.dot_dimension_numbers<[1], [0], [0], [1], [0, 0, 1, 1], [], []>} : vector<16x16xbf16>, vector<16x256xbf16>, vector<16x256xf32> -> vector<16x256xf32>
    %c0_3 = arith.constant 0 : index
    %c0_4 = arith.constant 0 : index
    %4 = vector.load %arg3[%c0_3, %c0_4] : memref<1x256xf32, #tpu.memory_space<vmem>>, vector<1x256xf32>
    %5 = vector.broadcast %4 : vector<1x256xf32> to vector<16x256xf32>
    %6 = arith.addf %3, %5 : vector<16x256xf32>
    %cst_5 = arith.constant 0.000000e+00 : f32
    %7 = vector.broadcast %cst_5 : f32 to vector<16x256xf32>
    %8 = arith.maximumf %6, %7 : vector<16x256xf32>
    %9 = arith.truncf %8 : vector<16x256xf32> to vector<16x256xbf16>
    %c0_6 = arith.constant 0 : index
    %c0_7 = arith.constant 0 : index
    %10 = vector.load %arg4[%c0_6, %c0_7] : memref<16x256xbf16, #tpu.memory_space<vmem>>, vector<16x256xbf16>
    tpu.vector_store %arg4[%c0_6, %c0_7], %9 {strides = array<i32>} : memref<16x256xbf16, #tpu.memory_space<vmem>>, vector<16x256xbf16>,
    return
  }
  func.func @transform_0(%arg0: i32) -> (i32, i32) {
    %c0_i32 = arith.constant 0 : i32
    %c0_i32_0 = arith.constant 0 : i32
    return %arg0, %c0_i32 : i32, i32
  }
  func.func @transform_1(%arg0: i32) -> (i32, i32) {
    %c0_i32 = arith.constant 0 : i32
    %c0_i32_0 = arith.constant 0 : i32
    %c0_i32_1 = arith.constant 0 : i32
    return %c0_i32, %c0_i32_0 : i32, i32
  }
  func.func @transform_2(%arg0: i32) -> (i32, i32) {
    %c0_i32 = arith.constant 0 : i32
    %c0_i32_0 = arith.constant 0 : i32
    %c0_i32_1 = arith.constant 0 : i32
    return %c0_i32, %c0_i32_0 : i32, i32
  }
  func.func @transform_3(%arg0: i32) -> (i32, i32) {
    %c0_i32 = arith.constant 0 : i32
    %c0_i32_0 = arith.constant 0 : i32
    return %arg0, %c0_i32 : i32, i32
  }
}

</mosaic_0001>

<llo_original>
// kernel: tpu_custom_call.1
$region0: #{tpu_custom_call.1}
  #allocation0 [shape = 'u32[]', space=smem, size = 0x4, offset = 0x4, fixed_abs, tag = 'smem constant byte address 0x4 - core index']
  #allocation1 [shape = 'u32[144,128]{1,0:T(1,128)}', space=vmem, size = 0x12000, scoped, tag = 'internal scratch']
  %s0 = inlined_call_operand.hbm [shape: f32[16,16], index: 0, kind: input, shape index: {}]
  %s1 = inlined_call_operand.hbm [shape: bf16[16,256], index: 1, kind: input, shape index: {}]
  %s2 = inlined_call_operand.vmem [shape: f32[1,256], index: 2, kind: input, shape index: {}]
  %s3 = inlined_call_operand.hbm [shape: bf16[16,256], index: 3, kind: output, shape index: {}]
  %s4 = sld [smem:[#allocation0]]
  $region30: #{tpu_custom_call.1} parent=0
    _
  %s6 = ssub.s32 1, %s4
  %s7 = scalar_select 0, %s6, %s4
  $region1: #{tpu_custom_call.1} parent=0
    #allocation2 [shape = 'u8[8192]{0}', space=vmem, size = 0x2000, scoped, tag = 'input window, operand 0, single buffered']
    #allocation3 [shape = 's32[1]{0}', space=sflag, size = 0x4, scoped, tag = 'scoped memory for tpu_custom_call.1']
    #allocation4 [shape = 's32[1]{0}', space=sflag, size = 0x4, scoped, tag = 'scoped memory for tpu_custom_call.1']
    #allocation5 [shape = 'u8[8192]{0}', space=vmem, size = 0x2000, scoped, tag = 'input window, operand 1, single buffered']
    #allocation6 [shape = 's32[1]{0}', space=sflag, size = 0x4, scoped, tag = 'scoped memory for tpu_custom_call.1']
    #allocation7 [shape = 'u8[8192]{0}', space=vmem, size = 0x2000, scoped, tag = 'output window, operand 0, single buffered']
    %8 = vsyncpa [#allocation3], 0
    %9 = vsyncpa [#allocation6], 0
    %10 = vsyncpa [#allocation4], 0
    // Predicated region
    $region2: #{tpu_custom_call.1} parent=1 // pred_check
      _
    $region3: #{tpu_custom_call.1} parent=1 // pred_check_branch
      %12 = sbr.rel (0) target = $region5
    $region4: #{tpu_custom_call.1} parent=1 // pred_region
      %s14 = ssub.s32 256, 256
      %15 = vsyncadd [#allocation3], %s14
      %s16 = sshll.u32 [#allocation2], 4
      %s17 = int_to_ptr.vmem [resolvable:$true] %s16
      %22 = dma.hbm_to_vmem [thread:$0]  %s0, 256, %s17, [#allocation3], 128, 128, 8
    $region5: #{tpu_custom_call.1} parent=1 // pred_fallthru
      _
    // Predicated region
    $region6: #{tpu_custom_call.1} parent=1 // pred_check
      _
    $region7: #{tpu_custom_call.1} parent=1 // pred_check_branch
      %24 = sbr.rel (0) target = $region9
    $region8: #{tpu_custom_call.1} parent=1 // pred_region
      %s26 = ssub.s32 256, 256
      %27 = vsyncadd [#allocation6], %s26
      %s28 = sshll.u32 [#allocation5], 4
      %s29 = int_to_ptr.vmem [resolvable:$true] %s28
      %34 = dma.hbm_to_vmem [thread:$0]  %s1, 256, %s29, [#allocation6], 128, 128, 8
    $region9: #{tpu_custom_call.1} parent=1 // pred_fallthru
      _
    // Predicated region
    $region10: #{tpu_custom_call.1} parent=1 // pred_check
      _
    $region11: #{tpu_custom_call.1} parent=1 // pred_check_branch
      %36 = sbr.rel (0) target = $region13
    $region12: #{tpu_custom_call.1} parent=1 // pred_region
      _
    $region13: #{tpu_custom_call.1} parent=1 // pred_fallthru
      _
    // Predicated region
    $region14: #{tpu_custom_call.1} parent=1 // pred_check
      _
    $region15: #{tpu_custom_call.1} parent=1 // pred_check_branch
      %38 = sbr.rel (0) target = $region17
    $region16: #{tpu_custom_call.1} parent=1 // pred_region
      %39 = dma.done [#allocation3], 256
    $region17: #{tpu_custom_call.1} parent=1 // pred_fallthru
      _
    // Predicated region
    $region18: #{tpu_custom_call.1} parent=1 // pred_check
      _
    $region19: #{tpu_custom_call.1} parent=1 // pred_check_branch
      %41 = sbr.rel (0) target = $region21
    $region20: #{tpu_custom_call.1} parent=1 // pred_region
      %42 = dma.done [#allocation6], 256
    $region21: #{tpu_custom_call.1} parent=1 // pred_fallthru
      _
    %v44 = vld [vmem:[#allocation2] sm:$0xff]
    %v45 = vld [vmem:[#allocation2 + $0x8] sm:$0xff]
    %v46 = vpack.c.bf16 %v45, %v44
    %v47 = vld [vmem:[#allocation5] sm:$0xff]
    %v48 = vld [vmem:[#allocation5 + $0x8] sm:$0xff]
    %v49 = vld [vmem:[%s2] sm:$0x3]
    %v51 = vlaneseq
    %v52 = vshrl.u32 %v51, 7
    %v53 = vsub.s32 0, %v52
    %v54 = vrot.slane %v49, %v53
    %v55 = vlaneseq
    %v56 = vshrl.u32 %v55, 7
    %v57 = vsub.s32 1, %v56
    %v58 = vrot.slane %v49, %v57
    %v63 = vunpack.c.l.b16 %v47
    %v64 = vunpack.c.h.b16 %v47
    %v65 = vunpack.c.l.b16 %v48
    %v66 = vunpack.c.h.b16 %v48
    %v67 = vpack.c.b16 %v65, %v63
    %v68 = vpack.c.b16 %v66, %v64
    %vm71 = vcmask 130048
    %v73 = vsel %vm71, %v46, 0
    %75 = vmatprep.subr.bf16.mxu0 0
    %76 = vmatpush1.bf16.msra.mxu0 0
    %77 = vmatprep.subr.bf16.mxu0 0
    %78 = vmatpush1.bf16.msra.mxu0 0
    %79 = vmatprep.subr.bf16.mxu0 0
    %80 = vmatpush1.bf16.msra.mxu0 0
    %81 = vmatprep.subr.bf16.mxu0 0
    %82 = vmatpush1.bf16.msra.mxu0 0
    %83 = vmatprep.subr.bf16.mxu0 0
    %84 = vmatpush1.bf16.msra.mxu0 0
    %85 = vmatprep.subr.bf16.mxu0 0
    %86 = vmatpush1.bf16.msra.mxu0 0
    %87 = vmatprep.subr.bf16.mxu0 0
    %88 = vmatpush1.bf16.msra.mxu0 0
    %89 = vmatprep.subr.bf16.mxu0 %v68
    %90 = vmatpush1.bf16.msra.mxu0 %v67
    %91 = vmatprep.subr.bf16.mxu0 0
    %92 = vmatpush2.bf16.msra.mxu0 0
    %93 = vmatprep.subr.bf16.mxu0 0
    %94 = vmatpush2.bf16.msra.mxu0 0
    %95 = vmatprep.subr.bf16.mxu0 0
    %96 = vmatpush2.bf16.msra.mxu0 0
    %97 = vmatprep.subr.bf16.mxu0 0
    %98 = vmatpush2.bf16.msra.mxu0 0
    %99 = vmatprep.subr.bf16.mxu0 0
    %100 = vmatpush2.bf16.msra.mxu0 0
    %101 = vmatprep.subr.bf16.mxu0 0
    %102 = vmatpush2.bf16.msra.mxu0 0
    %103 = vmatprep.subr.bf16.mxu0 0
    %104 = vmatpush2.bf16.msra.mxu0 0
    %105 = vmatprep.subr.bf16.mxu0 0
    %106 = vmatpush2.bf16.msra.mxu0 0
    %107 = vmatprep.mubr.bf16.mxu0 0
    %108 = vmatmul.mubr.bf16.gmra.mxu0 %v73
    %v109 = vpop.f32.mrf.mxu0
    %v110 = vadd.f32 %v54, %v109
    %v111 = vpop.f32.mrf.mxu0
    %v112 = vadd.f32 %v58, %v111
    %v113 = vpop.f32.mrf.mxu0
    %v114 = vadd.f32 %v54, %v113
    %v115 = vpop.f32.mrf.mxu0
    %v116 = vadd.f32 %v58, %v115
    %117 = vdwg.mxu0
    %v118 = vmax.f32 %v110, 0.0
    %v119 = vmax.f32 %v112, 0.0
    %v120 = vmax.f32 %v114, 0.0
    %v121 = vmax.f32 %v116, 0.0
    %v122 = vpack.c.bf16 %v120, %v118
    %v123 = vpack.c.bf16 %v121, %v119
    %v126 = vunpack.c.l.b16 %v122
    %v127 = vunpack.c.l.b16 %v123
    %v128 = vunpack.c.h.b16 %v122
    %v129 = vunpack.c.h.b16 %v123
    %v130 = vpack.c.b16 %v127, %v126
    %v131 = vpack.c.b16 %v129, %v128
    %134 = vst [vmem:[#allocation7] sm:$0xff] %v130
    %135 = vst [vmem:[#allocation7 + $0x8] sm:$0xff] %v131
    // Predicated region
    $region22: #{tpu_custom_call.1} parent=1 // pred_check
      _
    $region23: #{tpu_custom_call.1} parent=1 // pred_check_branch
      %137 = sbr.rel (0) target = $region25
    $region24: #{tpu_custom_call.1} parent=1 // pred_region
      %s139 = ssub.s32 256, 256
      %140 = vsyncadd [#allocation4], %s139
      %s141 = sshll.u32 [#allocation7], 4
      %s142 = int_to_ptr.vmem [resolvable:$true] %s141
      %147 = dma.vmem_to_hbm [thread:$0]  %s142, 256, %s3, [#allocation4], 128, 128, 8
    $region25: #{tpu_custom_call.1} parent=1 // pred_fallthru
      _
    // Predicated region
    $region26: #{tpu_custom_call.1} parent=1 // pred_check
      _
    $region27: #{tpu_custom_call.1} parent=1 // pred_check_branch
      %149 = sbr.rel (0) target = $region29
    $region28: #{tpu_custom_call.1} parent=1 // pred_region
      %150 = dma.done [#allocation4], 256
    $region29: #{tpu_custom_call.1} parent=1 // pred_fallthru
      _
    %151 = vsyncpa [#allocation3], 1
    %152 = vsyncpa [#allocation6], 1
    %153 = vsyncpa [#allocation4], 1

// kernel: tpu_custom_call.1
$region0: #{tpu_custom_call.1}
  #allocation0 [shape = 'u32[]', space=smem, size = 0x4, offset = 0x4, fixed_abs, tag = 'smem constant byte address 0x4 - core index']
  #allocation1 [shape = 'u32[144,128]{1,0:T(1,128)}', space=vmem, size = 0x12000, scoped, tag = 'internal scratch']
  %s0 = inlined_call_operand.hbm [shape: f32[16,16], index: 0, kind: input, shape index: {}]
  %s1 = inlined_call_operand.hbm [shape: bf16[16,256], index: 1, kind: input, shape index: {}]
  %s2 = inlined_call_operand.vmem [shape: f32[1,256], index: 2, kind: input, shape index: {}]
  %s3 = inlined_call_operand.hbm [shape: bf16[16,256], index: 3, kind: output, shape index: {}]
  %s4 = sld [smem:[#allocation0]]
  $region30: #{tpu_custom_call.1} parent=0
    _
  %s6 = ssub.s32 1, %s4
  %s7 = scalar_select 0, %s6, %s4
  $region1: #{tpu_custom_call.1} parent=0
    #allocation2 [shape = 'u8[8192]{0}', space=vmem, size = 0x2000, scoped, tag = 'input window, operand 0, single buffered']
    #allocation3 [shape = 's32[1]{0}', space=sflag, size = 0x4, scoped, tag = 'scoped memory for tpu_custom_call.1']
    #allocation4 [shape = 's32[1]{0}', space=sflag, size = 0x4, scoped, tag = 'scoped memory for tpu_custom_call.1']
    #allocation5 [shape = 'u8[8192]{0}', space=vmem, size = 0x2000, scoped, tag = 'input window, operand 1, single buffered']
    #allocation6 [shape = 's32[1]{0}', space=sflag, size = 0x4, scoped, tag = 'scoped memory for tpu_custom_call.1']
    #allocation7 [shape = 'u8[8192]{0}', space=vmem, size = 0x2000, scoped, tag = 'output window, operand 0, single buffered']
    %8 = vsyncpa [#allocation3], 0
    %9 = vsyncpa [#allocation6], 0
    %10 = vsyncpa [#allocation4], 0
    // Predicated region
    $region2: #{tpu_custom_call.1} parent=1 // pred_check
      _
    $region3: #{tpu_custom_call.1} parent=1 // pred_check_branch
      %12 = sbr.rel (0) target = $region5
    $region4: #{tpu_custom_call.1} parent=1 // pred_region
      %s14 = ssub.s32 256, 256
      %15 = vsyncadd [#allocation3], %s14
      %s16 = sshll.u32 [#allocation2], 4
      %s17 = int_to_ptr.vmem [resolvable:$true] %s16
      %22 = dma.hbm_to_vmem [thread:$0]  %s0, 256, %s17, [#allocation3], 128, 128, 8
    $region5: #{tpu_custom_call.1} parent=1 // pred_fallthru
      _
    // Predicated region
    $region6: #{tpu_custom_call.1} parent=1 // pred_check
      _
    $region7: #{tpu_custom_call.1} parent=1 // pred_check_branch
      %24 = sbr.rel (0) target = $region9
    $region8: #{tpu_custom_call.1} parent=1 // pred_region
      %s26 = ssub.s32 256, 256
      %27 = vsyncadd [#allocation6], %s26
      %s28 = sshll.u32 [#allocation5], 4
      %s29 = int_to_ptr.vmem [resolvable:$true] %s28
      %34 = dma.hbm_to_vmem [thread:$0]  %s1, 256, %s29, [#allocation6], 128, 128, 8
    $region9: #{tpu_custom_call.1} parent=1 // pred_fallthru
      _
    // Predicated region
    $region10: #{tpu_custom_call.1} parent=1 // pred_check
      _
    $region11: #{tpu_custom_call.1} parent=1 // pred_check_branch
      %36 = sbr.rel (0) target = $region13
    $region12: #{tpu_custom_call.1} parent=1 // pred_region
      _
    $region13: #{tpu_custom_call.1} parent=1 // pred_fallthru
      _
    // Predicated region
    $region14: #{tpu_custom_call.1} parent=1 // pred_check
      _
    $region15: #{tpu_custom_call.1} parent=1 // pred_check_branch
      %38 = sbr.rel (0) target = $region17
    $region16: #{tpu_custom_call.1} parent=1 // pred_region
      %39 = dma.done [#allocation3], 256
    $region17: #{tpu_custom_call.1} parent=1 // pred_fallthru
      _
    // Predicated region
    $region18: #{tpu_custom_call.1} parent=1 // pred_check
      _
    $region19: #{tpu_custom_call.1} parent=1 // pred_check_branch
      %41 = sbr.rel (0) target = $region21
    $region20: #{tpu_custom_call.1} parent=1 // pred_region
      %42 = dma.done [#allocation6], 256
    $region21: #{tpu_custom_call.1} parent=1 // pred_fallthru
      _
    %v44 = vld [vmem:[#allocation2] sm:$0xff]
    %v45 = vld [vmem:[#allocation2 + $0x8] sm:$0xff]
    %v46 = vpack.c.bf16 %v45, %v44
    %v47 = vld [vmem:[#allocation5] sm:$0xff]
    %v48 = vld [vmem:[#allocation5 + $0x8] sm:$0xff]
    %v49 = vld [vmem:[%s2] sm:$0x3]
    %v51 = vlaneseq
    %v52 = vshrl.u32 %v51, 7
    %v53 = vsub.s32 0, %v52
    %v54 = vrot.slane %v49, %v53
    %v55 = vlaneseq
    %v56 = vshrl.u32 %v55, 7
    %v57 = vsub.s32 1, %v56
    %v58 = vrot.slane %v49, %v57
    %v63 = vunpack.c.l.b16 %v47
    %v64 = vunpack.c.h.b16 %v47
    %v65 = vunpack.c.l.b16 %v48
    %v66 = vunpack.c.h.b16 %v48
    %v67 = vpack.c.b16 %v65, %v63
    %v68 = vpack.c.b16 %v66, %v64
    %vm71 = vcmask 130048
    %v73 = vsel %vm71, %v46, 0
    %75 = vmatprep.subr.bf16.mxu0 0
    %76 = vmatpush1.bf16.msra.mxu0 0
    %77 = vmatprep.subr.bf16.mxu0 0
    %78 = vmatpush1.bf16.msra.mxu0 0
    %79 = vmatprep.subr.bf16.mxu0 0
    %80 = vmatpush1.bf16.msra.mxu0 0
    %81 = vmatprep.subr.bf16.mxu0 0
    %82 = vmatpush1.bf16.msra.mxu0 0
    %83 = vmatprep.subr.bf16.mxu0 0
    %84 = vmatpush1.bf16.msra.mxu0 0
    %85 = vmatprep.subr.bf16.mxu0 0
    %86 = vmatpush1.bf16.msra.mxu0 0
    %87 = vmatprep.subr.bf16.mxu0 0
    %88 = vmatpush1.bf16.msra.mxu0 0
    %89 = vmatprep.subr.bf16.mxu0 %v68
    %90 = vmatpush1.bf16.msra.mxu0 %v67
    %91 = vmatprep.subr.bf16.mxu0 0
    %92 = vmatpush2.bf16.msra.mxu0 0
    %93 = vmatprep.subr.bf16.mxu0 0
    %94 = vmatpush2.bf16.msra.mxu0 0
    %95 = vmatprep.subr.bf16.mxu0 0
    %96 = vmatpush2.bf16.msra.mxu0 0
    %97 = vmatprep.subr.bf16.mxu0 0
    %98 = vmatpush2.bf16.msra.mxu0 0
    %99 = vmatprep.subr.bf16.mxu0 0
    %100 = vmatpush2.bf16.msra.mxu0 0
    %101 = vmatprep.subr.bf16.mxu0 0
    %102 = vmatpush2.bf16.msra.mxu0 0
    %103 = vmatprep.subr.bf16.mxu0 0
    %104 = vmatpush2.bf16.msra.mxu0 0
    %105 = vmatprep.subr.bf16.mxu0 0
    %106 = vmatpush2.bf16.msra.mxu0 0
    %107 = vmatprep.mubr.bf16.mxu0 0
    %108 = vmatmul.mubr.bf16.gmra.mxu0 %v73
    %v109 = vpop.f32.mrf.mxu0
    %v110 = vadd.f32 %v54, %v109
    %v111 = vpop.f32.mrf.mxu0
    %v112 = vadd.f32 %v58, %v111
    %v113 = vpop.f32.mrf.mxu0
    %v114 = vadd.f32 %v54, %v113
    %v115 = vpop.f32.mrf.mxu0
    %v116 = vadd.f32 %v58, %v115
    %117 = vdwg.mxu0
    %v118 = vmax.f32 %v110, 0.0
    %v119 = vmax.f32 %v112, 0.0
    %v120 = vmax.f32 %v114, 0.0
    %v121 = vmax.f32 %v116, 0.0
    %v122 = vpack.c.bf16 %v120, %v118
    %v123 = vpack.c.bf16 %v121, %v119
    %v126 = vunpack.c.l.b16 %v122
    %v127 = vunpack.c.l.b16 %v123
    %v128 = vunpack.c.h.b16 %v122
    %v129 = vunpack.c.h.b16 %v123
    %v130 = vpack.c.b16 %v127, %v126
    %v131 = vpack.c.b16 %v129, %v128
    %134 = vst [vmem:[#allocation7] sm:$0xff] %v130
    %135 = vst [vmem:[#allocation7 + $0x8] sm:$0xff] %v131
    // Predicated region
    $region22: #{tpu_custom_call.1} parent=1 // pred_check
      _
    $region23: #{tpu_custom_call.1} parent=1 // pred_check_branch
      %137 = sbr.rel (0) target = $region25
    $region24: #{tpu_custom_call.1} parent=1 // pred_region
      %s139 = ssub.s32 256, 256
      %140 = vsyncadd [#allocation4], %s139
      %s141 = sshll.u32 [#allocation7], 4
      %s142 = int_to_ptr.vmem [resolvable:$true] %s141
      %147 = dma.vmem_to_hbm [thread:$0]  %s142, 256, %s3, [#allocation4], 128, 128, 8
    $region25: #{tpu_custom_call.1} parent=1 // pred_fallthru
      _
    // Predicated region
    $region26: #{tpu_custom_call.1} parent=1 // pred_check
      _
    $region27: #{tpu_custom_call.1} parent=1 // pred_check_branch
      %149 = sbr.rel (0) target = $region29
    $region28: #{tpu_custom_call.1} parent=1 // pred_region
      %150 = dma.done [#allocation4], 256
    $region29: #{tpu_custom_call.1} parent=1 // pred_fallthru
      _
    %151 = vsyncpa [#allocation3], 1
    %152 = vsyncpa [#allocation6], 1
    %153 = vsyncpa [#allocation4], 1

</llo_original>
